<compile_context>
chip_gen: v6e
topology: v6e:2x2x1
jax: 0.10.0
libtpu: 0.0.40
codegen_flags: <defaults>
</compile_context>

<pallas_src>
import jax
import jax.numpy as jnp
import numpy as np
from jax.experimental import pallas as pl
from jax.experimental.pallas import tpu as pltpu


def qnet_kernel(x_ref, w1_ref, w2_ref, b2_ref, w3_ref, b3_ref,
                a1_ref, a2_ref, o_ref):
    # All activations are (features, batch_tile): batch on the 128-lane axis.
    # Layer 1 -- bias is already folded into w1's last column (ones row in x),
    # so the epilogue is just ReLU fused with the bf16 cast: the activation
    # materializes exactly once, in the matmul-operand dtype.
    h1 = jnp.dot(w1_ref[...], x_ref[...], preferred_element_type=jnp.float32)
    h1 = jnp.maximum(h1, 0.0).astype(w2_ref.dtype)                # (64, tb)
    # Layer 2: fused bias + ReLU + cast, f32 accumulate.
    h2 = jnp.dot(w2_ref[...], h1, preferred_element_type=jnp.float32)
    h2 = jnp.maximum(h2 + b2_ref[...], 0.0).astype(w3_ref.dtype)  # (64, tb)
    # Layer 3 + tanh (tanh lands on the EUP slot) + affine action rescale.
    y = jnp.dot(w3_ref[...], h2, preferred_element_type=jnp.float32)
    y = jnp.tanh(y + b3_ref[...])                                 # (A, tb)
    o_ref[...] = (a1_ref[...] + a2_ref[...] * y).astype(o_ref.dtype)


_TB_CAP = 8192  # lanes; bf16 state tile ~ 0.27 MiB, peak kernel VMEM a few MiB


def _round_up(x, m):
    return ((x + m - 1) // m) * m


def _pick_batch_tile(b_pad, batch_tile):
    """Largest lane-aligned tile <= _TB_CAP giving an even (>=2) step count."""
    if batch_tile is not None:
        assert b_pad % batch_tile == 0 and batch_tile % 128 == 0
        return batch_tile
    tb = (min(b_pad // 2, _TB_CAP) // 128) * 128
    while tb > 128:
        if b_pad % tb == 0 and (b_pad // tb) % 2 == 0:
            return tb
        tb -= 128
    return 128


def qnetwork_forward(state, params, *, batch_tile=None, use_bf16=True,
                     out_dtype=jnp.float32):
    """state: (B, state_dim) f32. params: PyTorch-layout weights, column biases.

    Returns (B, action_dim) in `out_dtype` (pass jnp.bfloat16 to halve the HBM
    writeback if the consumer tolerates bf16 action values)."""
    B, state_dim = state.shape
    hidden = params["w1"].shape[0]
    action_dim = params["w3"].shape[0]

    mm_dtype = jnp.bfloat16 if use_bf16 else jnp.float32

    # Lane-dense input with a ones row appended so layer-1's bias rides the
    # contraction (W1a = [W1 | b1]).  Under jit the transpose / cast / concat /
    # pad below fuse into ~one pass over the state.
    xT = jnp.concatenate(
        [state.T.astype(mm_dtype), jnp.ones((1, B), mm_dtype)], axis=0)

    b_pad = _round_up(B, 256)        # even, >=2 lane-dense grid steps (v7x)
    if b_pad != B:
        xT = jnp.pad(xT, ((0, 0), (0, b_pad - B)))
    tb = _pick_batch_tile(b_pad, batch_tile)

    w1a = jnp.concatenate([params["w1"], params["b1"]], axis=1).astype(mm_dtype)
    w2 = params["w2"].astype(mm_dtype)
    w3 = params["w3"].astype(mm_dtype)

    # Whole-array blocks with a constant (0,0) index_map: block index never
    # changes across the grid, so Pallas does not re-issue their DMAs per step.
    full = lambda shape: pl.BlockSpec(shape, lambda i: (0, 0))

    outT = pl.pallas_call(
        qnet_kernel,
        out_shape=jax.ShapeDtypeStruct((action_dim, b_pad), out_dtype),
        grid_spec=pltpu.PrefetchScalarGridSpec(
            num_scalar_prefetch=0,
            grid=(b_pad // tb,),
            in_specs=[
                pl.BlockSpec((state_dim + 1, tb), lambda i: (0, i)),  # [x; 1]
                full((hidden, state_dim + 1)),   # [W1 | b1]
                full((hidden, hidden)),          # W2
                full((hidden, 1)),               # b2 (f32)
                full((action_dim, hidden)),      # W3
                full((action_dim, 1)),           # b3 (f32)
                full((action_dim, 1)),           # a1 (f32)
                full((action_dim, 1)),           # a2 (f32)
            ],
            out_specs=pl.BlockSpec((action_dim, tb), lambda i: (0, i)),
        ),
        compiler_params=pltpu.CompilerParams(
            dimension_semantics=("parallel",),
            vmem_limit_bytes=32 * 1024 * 1024),
    )(xT, w1a, w2, params["b2"], w3, params["b3"], params["a1"], params["a2"])

    # Layout plumbing back to the PyTorch-facing (B, action_dim); fuses with the
    # consumer under jit.  For peak perf keep the caller in (action_dim, B).
    return outT[:, :B].T


def init_params(key, state_dim, action_dim, action_space, hidden=64):
    """Deterministic init. Weights in PyTorch layout (out, in); biases/a1/a2 as
    (dim, 1) columns that broadcast over the lane (batch) axis."""
    ks = jax.random.split(key, 6)

    def lin(kw, kb, fan_in, fan_out):
        bound = 1.0 / np.sqrt(fan_in)
        w = jax.random.uniform(kw, (fan_out, fan_in), jnp.float32, -bound, bound)
        b = jax.random.uniform(kb, (fan_out, 1), jnp.float32, -bound, bound)
        return w, b

    w1, b1 = lin(ks[0], ks[1], state_dim, hidden)
    w2, b2 = lin(ks[2], ks[3], hidden, hidden)
    w3, b3 = lin(ks[4], ks[5], hidden, action_dim)
    low, high = action_space
    a1 = (0.5 * (high + low)).reshape(action_dim, 1).astype(np.float32)
    a2 = (0.5 * (high - low)).reshape(action_dim, 1).astype(np.float32)
    return dict(w1=w1, b1=b1, w2=w2, b2=b2, w3=w3, b3=b3,
                a1=jnp.asarray(a1), a2=jnp.asarray(a2))


def qnetwork_ref(state, p):
    """Pure-JAX f32 reference matching the PyTorch module."""
    h1 = jax.nn.relu(state @ p["w1"].T + p["b1"].T)
    h2 = jax.nn.relu(h1 @ p["w2"].T + p["b2"].T)
    y = jnp.tanh(h2 @ p["w3"].T + p["b3"].T)
    return p["a1"].T + p["a2"].T * y


if __name__ == "__main__":
    # 256 rows -> padded batch stays 256 -> two 128-lane tiles -> 2-step
    # "parallel" grid (both v7x TensorCores busy) while staying small for the
    # smoke test.  Large batches automatically use up to 8192-lane tiles.
    B, STATE_DIM, ACTION_DIM = 256, 16, 4

    key = jax.random.PRNGKey(0)
    k_state, k_param = jax.random.split(key)

    # action_space = (low, high) vectors, e.g. actions in [-2, 2]
    action_space = (np.full((ACTION_DIM,), -2.0, np.float32),
                    np.full((ACTION_DIM,), 2.0, np.float32))

    params = init_params(k_param, STATE_DIM, ACTION_DIM, action_space)
    state = jax.random.normal(k_state, (B, STATE_DIM), jnp.float32)

    ref = qnetwork_ref(state, params)

    # f32 matmul path: near-exact semantics check (the bias fold only
    # reassociates the layer-1 accumulation).
    fwd_f32 = jax.jit(lambda s, p: qnetwork_forward(s, p, use_bf16=False))
    out_f32 = jax.block_until_ready(fwd_f32(state, params))
    np.testing.assert_allclose(np.asarray(out_f32), np.asarray(ref),
                               rtol=1e-5, atol=2e-5)

    # bf16 matmul-operand path (default perf path): looser tolerance.
    fwd_bf16 = jax.jit(lambda s, p: qnetwork_forward(s, p))
    out_bf16 = jax.block_until_ready(fwd_bf16(state, params))
    np.testing.assert_allclose(np.asarray(out_bf16), np.asarray(ref),
                               rtol=5e-2, atol=5e-2)

    # Ragged batch: exercises the pad-to-256 + slice path on the f32 kernel.
    out_ragged = jax.block_until_ready(fwd_f32(state[:37], params))
    np.testing.assert_allclose(np.asarray(out_ragged), np.asarray(ref)[:37],
                               rtol=1e-5, atol=2e-5)

    print("KERNEL_OK")
</pallas_src>

<mosaic_0001>
module attributes {stable_mosaic.version = 11 : i64} {
  func.func @qnet_kernel(%arg0: i32, %arg1: memref<17x128xf32, #tpu.memory_space<vmem>>, %arg2: memref<64x17xf32, #tpu.memory_space<vmem>>, %arg3: memref<64x64xf32, #tpu.memory_space<vmem>>, %arg4: memref<64x1xf32, #tpu.memory_space<vmem>>, %arg5: memref<4x64xf32, #tpu.memory_space<vmem>>, %arg6: memref<4x1xf32, #tpu.memory_space<vmem>>, %arg7: memref<4x1xf32, #tpu.memory_space<vmem>>, %arg8: memref<4x1xf32, #tpu.memory_space<vmem>>, %arg9: memref<4x128xf32, #tpu.memory_space<vmem>>) attributes {dimension_semantics = [#tpu.dimension_semantics<parallel>], iteration_bounds = array<i64: 2>, scalar_prefetch = 0 : i64, scratch_operands = 0 : i64, tpu.core_type = #tpu.core_type<tc>, window_params = [{transform_indices = @transform_0, window_bounds = array<i64: 17, 128>}, {pipeline_mode = #tpu.pipeline_mode<synchronous>, transform_indices = @transform_1, window_bounds = array<i64: 64, 17>}, {pipeline_mode = #tpu.pipeline_mode<synchronous>, transform_indices = @transform_2, window_bounds = array<i64: 64, 64>}, {pipeline_mode = #tpu.pipeline_mode<synchronous>, transform_indices = @transform_3, window_bounds = array<i64: 64, 1>}, {pipeline_mode = #tpu.pipeline_mode<synchronous>, transform_indices = @transform_4, window_bounds = array<i64: 4, 64>}, {pipeline_mode = #tpu.pipeline_mode<synchronous>, transform_indices = @transform_5, window_bounds = array<i64: 4, 1>}, {pipeline_mode = #tpu.pipeline_mode<synchronous>, transform_indices = @transform_6, window_bounds = array<i64: 4, 1>}, {pipeline_mode = #tpu.pipeline_mode<synchronous>, transform_indices = @transform_7, window_bounds = array<i64: 4, 1>}, {transform_indices = @transform_8, window_bounds = array<i64: 4, 128>}]} {
    %c0 = arith.constant 0 : index
    %c0_0 = arith.constant 0 : index
    %0 = vector.load %arg2[%c0, %c0_0] : memref<64x17xf32, #tpu.memory_space<vmem>>, vector<64x17xf32>
    %c0_1 = arith.constant 0 : index
    %c0_2 = arith.constant 0 : index
    %1 = vector.load %arg1[%c0_1, %c0_2] : memref<17x128xf32, #tpu.memory_space<vmem>>, vector<17x128xf32>
    %cst = arith.constant dense<0.000000e+00> : vector<64x128xf32>
    %2 = tpu.matmul %0, %1, %cst {dimension_numbers = #tpu.dot_dimension_numbers<[1], [0], [0], [1], [0, 0, 1, 1], [], []>} : vector<64x17xf32>, vector<17x128xf32>, vector<64x128xf32> -> vector<64x128xf32>
    %cst_3 = arith.constant 0.000000e+00 : f32
    %3 = vector.broadcast %cst_3 : f32 to vector<64x128xf32>
    %4 = arith.maximumf %2, %3 : vector<64x128xf32>
    %c0_4 = arith.constant 0 : index
    %c0_5 = arith.constant 0 : index
    %5 = vector.load %arg3[%c0_4, %c0_5] : memref<64x64xf32, #tpu.memory_space<vmem>>, vector<64x64xf32>
    %cst_6 = arith.constant dense<0.000000e+00> : vector<64x128xf32>
    %6 = tpu.matmul %5, %4, %cst_6 {dimension_numbers = #tpu.dot_dimension_numbers<[1], [0], [0], [1], [0, 0, 1, 1], [], []>} : vector<64x64xf32>, vector<64x128xf32>, vector<64x128xf32> -> vector<64x128xf32>
    %c0_7 = arith.constant 0 : index
    %c0_8 = arith.constant 0 : index
    %7 = vector.load %arg4[%c0_7, %c0_8] : memref<64x1xf32, #tpu.memory_space<vmem>>, vector<64x1xf32>
    %8 = vector.broadcast %7 : vector<64x1xf32> to vector<64x128xf32>
    %9 = arith.addf %6, %8 : vector<64x128xf32>
    %cst_9 = arith.constant 0.000000e+00 : f32
    %10 = vector.broadcast %cst_9 : f32 to vector<64x128xf32>
    %11 = arith.maximumf %9, %10 : vector<64x128xf32>
    %c0_10 = arith.constant 0 : index
    %c0_11 = arith.constant 0 : index
    %12 = vector.load %arg5[%c0_10, %c0_11] : memref<4x64xf32, #tpu.memory_space<vmem>>, vector<4x64xf32>
    %cst_12 = arith.constant dense<0.000000e+00> : vector<4x128xf32>
    %13 = tpu.matmul %12, %11, %cst_12 {dimension_numbers = #tpu.dot_dimension_numbers<[1], [0], [0], [1], [0, 0, 1, 1], [], []>} : vector<4x64xf32>, vector<64x128xf32>, vector<4x128xf32> -> vector<4x128xf32>
    %c0_13 = arith.constant 0 : index
    %c0_14 = arith.constant 0 : index
    %14 = vector.load %arg6[%c0_13, %c0_14] : memref<4x1xf32, #tpu.memory_space<vmem>>, vector<4x1xf32>
    %15 = vector.broadcast %14 : vector<4x1xf32> to vector<4x128xf32>
    %16 = arith.addf %13, %15 : vector<4x128xf32>
    %17 = math.tanh %16 : vector<4x128xf32>
    %c0_15 = arith.constant 0 : index
    %c0_16 = arith.constant 0 : index
    %18 = vector.load %arg7[%c0_15, %c0_16] : memref<4x1xf32, #tpu.memory_space<vmem>>, vector<4x1xf32>
    %c0_17 = arith.constant 0 : index
    %c0_18 = arith.constant 0 : index
    %19 = vector.load %arg8[%c0_17, %c0_18] : memref<4x1xf32, #tpu.memory_space<vmem>>, vector<4x1xf32>
    %20 = vector.broadcast %19 : vector<4x1xf32> to vector<4x128xf32>
    %21 = arith.mulf %20, %17 : vector<4x128xf32>
    %22 = vector.broadcast %18 : vector<4x1xf32> to vector<4x128xf32>
    %23 = arith.addf %22, %21 : vector<4x128xf32>
    %c0_19 = arith.constant 0 : index
    %c0_20 = arith.constant 0 : index
    %24 = vector.load %arg9[%c0_19, %c0_20] : memref<4x128xf32, #tpu.memory_space<vmem>>, vector<4x128xf32>
    tpu.vector_store %arg9[%c0_19, %c0_20], %23 {strides = array<i32>} : memref<4x128xf32, #tpu.memory_space<vmem>>, vector<4x128xf32>,
    return
  }
  func.func @transform_0(%arg0: i32) -> (i32, i32) {
    %c0_i32 = arith.constant 0 : i32
    %c0_i32_0 = arith.constant 0 : i32
    return %c0_i32, %arg0 : i32, i32
  }
  func.func @transform_1(%arg0: i32) -> (i32, i32) {
    %c0_i32 = arith.constant 0 : i32
    %c0_i32_0 = arith.constant 0 : i32
    %c0_i32_1 = arith.constant 0 : i32
    return %c0_i32, %c0_i32_0 : i32, i32
  }
  func.func @transform_2(%arg0: i32) -> (i32, i32) {
    %c0_i32 = arith.constant 0 : i32
    %c0_i32_0 = arith.constant 0 : i32
    %c0_i32_1 = arith.constant 0 : i32
    return %c0_i32, %c0_i32_0 : i32, i32
  }
  func.func @transform_3(%arg0: i32) -> (i32, i32) {
    %c0_i32 = arith.constant 0 : i32
    %c0_i32_0 = arith.constant 0 : i32
    %c0_i32_1 = arith.constant 0 : i32
    return %c0_i32, %c0_i32_0 : i32, i32
  }
  func.func @transform_4(%arg0: i32) -> (i32, i32) {
    %c0_i32 = arith.constant 0 : i32
    %c0_i32_0 = arith.constant 0 : i32
    %c0_i32_1 = arith.constant 0 : i32
    return %c0_i32, %c0_i32_0 : i32, i32
  }
  func.func @transform_5(%arg0: i32) -> (i32, i32) {
    %c0_i32 = arith.constant 0 : i32
    %c0_i32_0 = arith.constant 0 : i32
    %c0_i32_1 = arith.constant 0 : i32
    return %c0_i32, %c0_i32_0 : i32, i32
  }
  func.func @transform_6(%arg0: i32) -> (i32, i32) {
    %c0_i32 = arith.constant 0 : i32
    %c0_i32_0 = arith.constant 0 : i32
    %c0_i32_1 = arith.constant 0 : i32
    return %c0_i32, %c0_i32_0 : i32, i32
  }
  func.func @transform_7(%arg0: i32) -> (i32, i32) {
    %c0_i32 = arith.constant 0 : i32
    %c0_i32_0 = arith.constant 0 : i32
    %c0_i32_1 = arith.constant 0 : i32
    return %c0_i32, %c0_i32_0 : i32, i32
  }
  func.func @transform_8(%arg0: i32) -> (i32, i32) {
    %c0_i32 = arith.constant 0 : i32
    %c0_i32_0 = arith.constant 0 : i32
    return %c0_i32, %arg0 : i32, i32
  }
}

</mosaic_0001>

<llo_original>
// kernel: _lambda_.1
$region0: #{_lambda_.1}
  #allocation0 [shape = 'u32[]', space=smem, size = 0x4, offset = 0x4, fixed_abs, tag = 'smem constant byte address 0x4 - core index']
  #allocation1 [shape = 'u32[144,128]{1,0:T(1,128)}', space=vmem, size = 0x12000, scoped, tag = 'internal scratch']
  %s0 = inlined_call_operand.vmem [shape: f32[17,256], index: 0, kind: input, shape index: {}]
  %s1 = inlined_call_operand.vmem [shape: f32[64,17], index: 1, kind: input, shape index: {}]
  %s2 = inlined_call_operand.vmem [shape: f32[64,64], index: 2, kind: input, shape index: {}]
  %s3 = inlined_call_operand.vmem [shape: f32[64,1], index: 3, kind: input, shape index: {}]
  %s4 = inlined_call_operand.vmem [shape: f32[4,64], index: 4, kind: input, shape index: {}]
  %s5 = inlined_call_operand.vmem [shape: f32[4,1], index: 5, kind: input, shape index: {}]
  %s6 = inlined_call_operand.vmem [shape: f32[4,1], index: 6, kind: input, shape index: {}]
  %s7 = inlined_call_operand.vmem [shape: f32[4,1], index: 7, kind: input, shape index: {}]
  %s8 = inlined_call_operand.hbm [shape: f32[4,256], index: 8, kind: output, shape index: {}]
  %s9 = sld [smem:[#allocation0]]
  $region103: #{_lambda_.1} parent=0
    _
  %s11 = ssub.s32 1, %s9
  %s12 = scalar_select 0, %s11, %s9
  $region1: #{_lambda_.1} parent=0
    #allocation2 [shape = 'u8[24576]{0}', space=vmem, size = 0x6000, scoped, tag = 'input window, operand 0']
    #allocation3 [shape = 'u8[4096]{0}', space=vmem, size = 0x1000, scoped, tag = 'output window, operand 0']
    #allocation4 [shape = 's32[2]{0}', space=sflag, size = 0x8, scoped, tag = 'scoped memory for _lambda_.1']
    %13 = vsyncpa [#allocation4], 0
    %s14 = scalar_lea.sflag [#allocation4], 1
    %15 = vsyncpa %s14, 0
    loop: start=0, step=1, limit=4
    $region2: #{_lambda_.1} parent=1 // loop_pre_header
      _
    $region3: #{_lambda_.1} parent=1 // loop_header
      %s17 = sphi 0, %s21
      %p18 = scmp.ge.s32.totalorder %s17, 4
      %s27 = sphi 0, %s29
      %s30 = sphi 0, %s27
      %s31 = sphi 0, %s30
      %s47 = sphi 0, %s31
      %s51 = sphi 0, %s51
      %s53 = sphi 0, %s51
      %s54 = sphi 0, %s53
      %s68 = sphi 0, %s54
      %s72 = sphi 0, %s72
      %s74 = sphi 0, %s72
      %s75 = sphi 0, %s74
      %s89 = sphi 0, %s75
      %s93 = sphi 0, %s93
      %s95 = sphi 0, %s93
      %s96 = sphi 0, %s95
      %s110 = sphi 0, %s96
      %s114 = sphi 0, %s114
      %s116 = sphi 0, %s114
      %s117 = sphi 0, %s116
      %s131 = sphi 0, %s117
      %s135 = sphi 0, %s135
      %s137 = sphi 0, %s135
      %s138 = sphi 0, %s137
      %s152 = sphi 0, %s138
      %s156 = sphi 0, %s156
      %s158 = sphi 0, %s156
      %s159 = sphi 0, %s158
      %s173 = sphi 0, %s159
      %s177 = sphi 0, %s177
      %s179 = sphi 0, %s177
      %s180 = sphi 0, %s179
      %s194 = sphi 0, %s180
      %s200 = sphi 0, %s202
      %s203 = sphi 0, %s200
      %s204 = sphi 0, %s203
      %s220 = sphi 0, %s204
    $region4: #{_lambda_.1} parent=1 // loop_header_branch
      %20 = sbr.rel (%p18) target = $region8
    $region5: #{_lambda_.1} parent=1 // loop_body
      %s22 = ssub.s32 %s17, 1
      %s23 = ssub.s32 %s17, 2
      %s24 = sadd.s32 %s17, 1
      %s25 = ssub.s32 %s17, %s24
      %p26 = scmp.eq.s32.totalorder %s25, 0
      %s28 = sadd.s32 %s27, 1
      %s29 = scalar_select %p26, %s27, %s28
      %p32 = pneg %p26
      %p33 = scmp.eq.s32.totalorder %s17, 1
      %p34 = por %p32, %p33
      %p35 = scmp.ne.s32.totalorder %s27, %s30
      %p36 = scmp.eq.s32.totalorder %s17, 0
      %p37 = por %p35, %p36
      %p38 = scmp.ne.s32.totalorder %s27, %s30
      %p39 = scmp.eq.s32.totalorder %s22, 1
      %p40 = por %p38, %p39
      %p41 = scmp.ne.s32.totalorder %s30, %s31
      %p42 = scmp.eq.s32.totalorder %s22, 0
      %p43 = por %p41, %p42
      %p44 = scmp.ne.s32.totalorder %s30, %s31
      %p45 = scmp.eq.s32.totalorder %s23, 1
      %p46 = por %p44, %p45
      %p48 = scmp.ne.s32.totalorder %s31, %s47
      %p49 = scmp.eq.s32.totalorder %s23, 0
      %p50 = por %p48, %p49
      %s52 = sadd.s32 %s51, 1
      %p55 = scmp.eq.s32.totalorder %s17, 1
      %p56 = scmp.ne.s32.totalorder %s51, %s53
      %p57 = scmp.eq.s32.totalorder %s17, 0
      %p58 = por %p56, %p57
      %p59 = scmp.ne.s32.totalorder %s51, %s53
      %p60 = scmp.eq.s32.totalorder %s22, 1
      %p61 = por %p59, %p60
      %p62 = scmp.ne.s32.totalorder %s53, %s54
      %p63 = scmp.eq.s32.totalorder %s22, 0
      %p64 = por %p62, %p63
      %p65 = scmp.ne.s32.totalorder %s53, %s54
      %p66 = scmp.eq.s32.totalorder %s23, 1
      %p67 = por %p65, %p66
      %p69 = scmp.ne.s32.totalorder %s54, %s68
      %p70 = scmp.eq.s32.totalorder %s23, 0
      %p71 = por %p69, %p70
      %s73 = sadd.s32 %s72, 1
      %p76 = scmp.eq.s32.totalorder %s17, 1
      %p77 = scmp.ne.s32.totalorder %s72, %s74
      %p78 = scmp.eq.s32.totalorder %s17, 0
      %p79 = por %p77, %p78
      %p80 = scmp.ne.s32.totalorder %s72, %s74
      %p81 = scmp.eq.s32.totalorder %s22, 1
      %p82 = por %p80, %p81
      %p83 = scmp.ne.s32.totalorder %s74, %s75
      %p84 = scmp.eq.s32.totalorder %s22, 0
      %p85 = por %p83, %p84
      %p86 = scmp.ne.s32.totalorder %s74, %s75
      %p87 = scmp.eq.s32.totalorder %s23, 1
      %p88 = por %p86, %p87
      %p90 = scmp.ne.s32.totalorder %s75, %s89
      %p91 = scmp.eq.s32.totalorder %s23, 0
      %p92 = por %p90, %p91
      %s94 = sadd.s32 %s93, 1
      %p97 = scmp.eq.s32.totalorder %s17, 1
      %p98 = scmp.ne.s32.totalorder %s93, %s95
      %p99 = scmp.eq.s32.totalorder %s17, 0
      %p100 = por %p98, %p99
      %p101 = scmp.ne.s32.totalorder %s93, %s95
      %p102 = scmp.eq.s32.totalorder %s22, 1
      %p103 = por %p101, %p102
      %p104 = scmp.ne.s32.totalorder %s95, %s96
      %p105 = scmp.eq.s32.totalorder %s22, 0
      %p106 = por %p104, %p105
      %p107 = scmp.ne.s32.totalorder %s95, %s96
      %p108 = scmp.eq.s32.totalorder %s23, 1
      %p109 = por %p107, %p108
      %p111 = scmp.ne.s32.totalorder %s96, %s110
      %p112 = scmp.eq.s32.totalorder %s23, 0
      %p113 = por %p111, %p112
      %s115 = sadd.s32 %s114, 1
      %p118 = scmp.eq.s32.totalorder %s17, 1
      %p119 = scmp.ne.s32.totalorder %s114, %s116
      %p120 = scmp.eq.s32.totalorder %s17, 0
      %p121 = por %p119, %p120
      %p122 = scmp.ne.s32.totalorder %s114, %s116
      %p123 = scmp.eq.s32.totalorder %s22, 1
      %p124 = por %p122, %p123
      %p125 = scmp.ne.s32.totalorder %s116, %s117
      %p126 = scmp.eq.s32.totalorder %s22, 0
      %p127 = por %p125, %p126
      %p128 = scmp.ne.s32.totalorder %s116, %s117
      %p129 = scmp.eq.s32.totalorder %s23, 1
      %p130 = por %p128, %p129
      %p132 = scmp.ne.s32.totalorder %s117, %s131
      %p133 = scmp.eq.s32.totalorder %s23, 0
      %p134 = por %p132, %p133
      %s136 = sadd.s32 %s135, 1
      %p139 = scmp.eq.s32.totalorder %s17, 1
      %p140 = scmp.ne.s32.totalorder %s135, %s137
      %p141 = scmp.eq.s32.totalorder %s17, 0
      %p142 = por %p140, %p141
      %p143 = scmp.ne.s32.totalorder %s135, %s137
      %p144 = scmp.eq.s32.totalorder %s22, 1
      %p145 = por %p143, %p144
      %p146 = scmp.ne.s32.totalorder %s137, %s138
      %p147 = scmp.eq.s32.totalorder %s22, 0
      %p148 = por %p146, %p147
      %p149 = scmp.ne.s32.totalorder %s137, %s138
      %p150 = scmp.eq.s32.totalorder %s23, 1
      %p151 = por %p149, %p150
      %p153 = scmp.ne.s32.totalorder %s138, %s152
      %p154 = scmp.eq.s32.totalorder %s23, 0
      %p155 = por %p153, %p154
      %s157 = sadd.s32 %s156, 1
      %p160 = scmp.eq.s32.totalorder %s17, 1
      %p161 = scmp.ne.s32.totalorder %s156, %s158
      %p162 = scmp.eq.s32.totalorder %s17, 0
      %p163 = por %p161, %p162
      %p164 = scmp.ne.s32.totalorder %s156, %s158
      %p165 = scmp.eq.s32.totalorder %s22, 1
      %p166 = por %p164, %p165
      %p167 = scmp.ne.s32.totalorder %s158, %s159
      %p168 = scmp.eq.s32.totalorder %s22, 0
      %p169 = por %p167, %p168
      %p170 = scmp.ne.s32.totalorder %s158, %s159
      %p171 = scmp.eq.s32.totalorder %s23, 1
      %p172 = por %p170, %p171
      %p174 = scmp.ne.s32.totalorder %s159, %s173
      %p175 = scmp.eq.s32.totalorder %s23, 0
      %p176 = por %p174, %p175
      %s178 = sadd.s32 %s177, 1
      %p181 = scmp.eq.s32.totalorder %s17, 1
      %p182 = scmp.ne.s32.totalorder %s177, %s179
      %p183 = scmp.eq.s32.totalorder %s17, 0
      %p184 = por %p182, %p183
      %p185 = scmp.ne.s32.totalorder %s177, %s179
      %p186 = scmp.eq.s32.totalorder %s22, 1
      %p187 = por %p185, %p186
      %p188 = scmp.ne.s32.totalorder %s179, %s180
      %p189 = scmp.eq.s32.totalorder %s22, 0
      %p190 = por %p188, %p189
      %p191 = scmp.ne.s32.totalorder %s179, %s180
      %p192 = scmp.eq.s32.totalorder %s23, 1
      %p193 = por %p191, %p192
      %p195 = scmp.ne.s32.totalorder %s180, %s194
      %p196 = scmp.eq.s32.totalorder %s23, 0
      %p197 = por %p195, %p196
      %s198 = ssub.s32 %s17, %s24
      %p199 = scmp.eq.s32.totalorder %s198, 0
      %s201 = sadd.s32 %s200, 1
      %s202 = scalar_select %p199, %s200, %s201
      %p205 = pneg %p199
      %p206 = scmp.eq.s32.totalorder %s17, 1
      %p207 = por %p205, %p206
      %p208 = scmp.ne.s32.totalorder %s200, %s203
      %p209 = scmp.eq.s32.totalorder %s17, 0
      %p210 = por %p208, %p209
      %p211 = scmp.ne.s32.totalorder %s200, %s203
      %p212 = scmp.eq.s32.totalorder %s22, 1
      %p213 = por %p211, %p212
      %p214 = scmp.ne.s32.totalorder %s203, %s204
      %p215 = scmp.eq.s32.totalorder %s22, 0
      %p216 = por %p214, %p215
      %p217 = scmp.ne.s32.totalorder %s203, %s204
      %p218 = scmp.eq.s32.totalorder %s23, 1
      %p219 = por %p217, %p218
      %p221 = scmp.ne.s32.totalorder %s204, %s220
      %p222 = scmp.eq.s32.totalorder %s23, 0
      %p223 = por %p221, %p222
      %p224 = scmp.le.s32.totalorder 1, %s17
      %p225 = scmp.lt.s32.totalorder %s17, 3
      %p226 = pnand %p224, %p225
      %p227 = pneg %p226
      // Predicated region
      $region9: #{_lambda_.1} parent=5 // pred_check
        _
      $region10: #{_lambda_.1} parent=5 // pred_check_branch
        %229 = sbr.rel (%p226) target = $region12
      $region11: #{_lambda_.1} parent=5 // pred_region
        %s230 = ssub.s32 %s17, 1
        // Predicated region
        $region13: #{_lambda_.1} parent=11 // pred_check
          %p231 = pneg %p64
        $region14: #{_lambda_.1} parent=11 // pred_check_branch
          %233 = sbr.rel (%p231) target = $region16
        $region15: #{_lambda_.1} parent=11 // pred_region
          _
        $region16: #{_lambda_.1} parent=11 // pred_fallthru
          _
        // Predicated region
        $region17: #{_lambda_.1} parent=11 // pred_check
          %p234 = pneg %p85
        $region18: #{_lambda_.1} parent=11 // pred_check_branch
          %236 = sbr.rel (%p234) target = $region20
        $region19: #{_lambda_.1} parent=11 // pred_region
          _
        $region20: #{_lambda_.1} parent=11 // pred_fallthru
          _
        // Predicated region
        $region21: #{_lambda_.1} parent=11 // pred_check
          %p237 = pneg %p106
        $region22: #{_lambda_.1} parent=11 // pred_check_branch
          %239 = sbr.rel (%p237) target = $region24
        $region23: #{_lambda_.1} parent=11 // pred_region
          _
        $region24: #{_lambda_.1} parent=11 // pred_fallthru
          _
        // Predicated region
        $region25: #{_lambda_.1} parent=11 // pred_check
          %p240 = pneg %p127
        $region26: #{_lambda_.1} parent=11 // pred_check_branch
          %242 = sbr.rel (%p240) target = $region28
        $region27: #{_lambda_.1} parent=11 // pred_region
          _
        $region28: #{_lambda_.1} parent=11 // pred_fallthru
          _
        // Predicated region
        $region29: #{_lambda_.1} parent=11 // pred_check
          %p243 = pneg %p148
        $region30: #{_lambda_.1} parent=11 // pred_check_branch
          %245 = sbr.rel (%p243) target = $region32
        $region31: #{_lambda_.1} parent=11 // pred_region
          _
        $region32: #{_lambda_.1} parent=11 // pred_fallthru
          _
        // Predicated region
        $region33: #{_lambda_.1} parent=11 // pred_check
          %p246 = pneg %p169
        $region34: #{_lambda_.1} parent=11 // pred_check_branch
          %248 = sbr.rel (%p246) target = $region36
        $region35: #{_lambda_.1} parent=11 // pred_region
          _
        $region36: #{_lambda_.1} parent=11 // pred_fallthru
          _
        // Predicated region
        $region37: #{_lambda_.1} parent=11 // pred_check
          %p249 = pneg %p190
        $region38: #{_lambda_.1} parent=11 // pred_check_branch
          %251 = sbr.rel (%p249) target = $region40
        $region39: #{_lambda_.1} parent=11 // pred_region
          _
        $region40: #{_lambda_.1} parent=11 // pred_fallthru
          _
      $region12: #{_lambda_.1} parent=5 // pred_fallthru
        _
      %p252 = scmp.lt.s32.totalorder %s17, 2
      // Predicated region
      $region41: #{_lambda_.1} parent=5 // pred_check
        %p253 = pneg %p252
      $region42: #{_lambda_.1} parent=5 // pred_check_branch
        %255 = sbr.rel (%p253) target = $region44
      $region43: #{_lambda_.1} parent=5 // pred_region
        // Predicated region
        $region45: #{_lambda_.1} parent=43 // pred_check
          %p256 = pneg %p37
        $region46: #{_lambda_.1} parent=43 // pred_check_branch
          %258 = sbr.rel (%p256) target = $region48
        $region47: #{_lambda_.1} parent=43 // pred_region
          %s259 = sand.u32 %s27, 1
          %s260 = sand.u32 %s27, 1
          %s261 = smul.addr %s260, 24
          %s262 = scalar_lea.vmem [#allocation2], %s261
          %s263 = smul.addr %s17, 8
          %s264 = scalar_lea.vmem %s0, %s263
          // Predicated region
          $region49: #{_lambda_.1} parent=47 // pred_check
            _
          $region50: #{_lambda_.1} parent=47 // pred_check_branch
            %266 = sbr.rel (0) target = $region52
          $region51: #{_lambda_.1} parent=47 // pred_region
            // Predicated region
            $region53: #{_lambda_.1} parent=51 // pred_check
              _
            $region54: #{_lambda_.1} parent=51 // pred_check_branch
              %268 = sbr.rel (0) target = $region56
            $region55: #{_lambda_.1} parent=51 // pred_region
              // Predicated region
              $region68: #{_lambda_.1} parent=55 // pred_check
                _
              $region69: #{_lambda_.1} parent=55 // pred_check_branch
                %288 = sbr.rel (0) target = $region71
              $region70: #{_lambda_.1} parent=55 // pred_region
                loop: start=0, step=1, limit=1
                $region72: #{_lambda_.1} parent=70 // loop_pre_header
                  _
                $region73: #{_lambda_.1} parent=70 // loop_header
                  %s290 = sphi 0, %s294
                  %p291 = scmp.ge.s32.totalorder %s290, 1
                  %s295 = sphi %s264, %s264
                  %s296 = sphi %s262, %s262
                $region74: #{_lambda_.1} parent=70 // loop_header_branch
                  %293 = sbr.rel (%p291) target = $region78
                $region75: #{_lambda_.1} parent=70 // loop_body
                  %v297 = vld [vmem:[%s295] sm:$0xff]
                  %298 = vst [vmem:[%s296] sm:$0xff] %v297
                  %v299 = vld [vmem:[%s295 + $0x10] sm:$0xff]
                  %300 = vst [vmem:[%s296 + $0x8] sm:$0xff] %v299
                  %v301 = vld [vmem:[%s295 + $0x20] sm:$0xff]
                  %302 = vst [vmem:[%s296 + $0x10] sm:$0xff] %v301
                $region76: #{_lambda_.1} parent=70 // loop_footer
                  %s294 = sadd.s32 1, %s290
                $region77: #{_lambda_.1} parent=70 // loop_footer_branch
                  %289 = sbr.rel target = $region73
                $region78: #{_lambda_.1} parent=70 // loop_exit
                  _
              $region71: #{_lambda_.1} parent=55 // pred_fallthru
                _
              // Predicated region
              $region79: #{_lambda_.1} parent=55 // pred_check
                _
              $region80: #{_lambda_.1} parent=55 // pred_check_branch
                %304 = sbr.rel target = $region82
              $region81: #{_lambda_.1} parent=55 // pred_region
                _
              $region82: #{_lambda_.1} parent=55 // pred_fallthru
                _
            $region56: #{_lambda_.1} parent=51 // pred_fallthru
              _
            // Predicated region
            $region57: #{_lambda_.1} parent=51 // pred_check
              _
            $region58: #{_lambda_.1} parent=51 // pred_check_branch
              %270 = sbr.rel target = $region60
            $region59: #{_lambda_.1} parent=51 // pred_region
              %s272 = ssub.s32 256, 1
              loop: start=0, step=1, limit=1
              $region61: #{_lambda_.1} parent=59 // loop_pre_header
                _
              $region62: #{_lambda_.1} parent=59 // loop_header
                %s274 = sphi 0, %s278
                %p275 = scmp.ge.s32.totalorder %s274, 1
                %s279 = sphi %s264, %s264
                %s280 = sphi %s262, %s262
              $region63: #{_lambda_.1} parent=59 // loop_header_branch
                %277 = sbr.rel (%p275) target = $region67
              $region64: #{_lambda_.1} parent=59 // loop_body
                %v281 = vld [vmem:[%s279] sm:%s272]
                %282 = vst [vmem:[%s280] sm:%s272] %v281
                %v283 = vld [vmem:[%s279 + $0x10] sm:%s272]
                %284 = vst [vmem:[%s280 + $0x8] sm:%s272] %v283
                %v285 = vld [vmem:[%s279 + $0x20] sm:%s272]
                %286 = vst [vmem:[%s280 + $0x10] sm:%s272] %v285
              $region65: #{_lambda_.1} parent=59 // loop_footer
                %s278 = sadd.s32 1, %s274
              $region66: #{_lambda_.1} parent=59 // loop_footer_branch
                %273 = sbr.rel target = $region62
              $region67: #{_lambda_.1} parent=59 // loop_exit
                _
            $region60: #{_lambda_.1} parent=51 // pred_fallthru
              _
          $region52: #{_lambda_.1} parent=47 // pred_fallthru
            _
          %305 = vnop
        $region48: #{_lambda_.1} parent=43 // pred_fallthru
          _
      $region44: #{_lambda_.1} parent=5 // pred_fallthru
        _
      %p306 = scmp.le.s32.totalorder 1, %s17
      %p307 = scmp.lt.s32.totalorder %s17, 3
      %p308 = pnand %p306, %p307
      %p309 = pneg %p308
      // Predicated region
      $region83: #{_lambda_.1} parent=5 // pred_check
        _
      $region84: #{_lambda_.1} parent=5 // pred_check_branch
        %311 = sbr.rel (%p308) target = $region86
      $region85: #{_lambda_.1} parent=5 // pred_region
        %s312 = ssub.s32 %s17, 1
        %s313 = sand.u32 %s30, 1
        %s314 = sand.u32 %s30, 1
        %s315 = smul.addr %s314, 24
        %s316 = scalar_lea.vmem [#allocation2], %s315
        // Predicated region
        $region87: #{_lambda_.1} parent=85 // pred_check
          %p317 = pneg %p43
        $region88: #{_lambda_.1} parent=85 // pred_check_branch
          %319 = sbr.rel (%p317) target = $region90
        $region89: #{_lambda_.1} parent=85 // pred_region
          _
        $region90: #{_lambda_.1} parent=85 // pred_fallthru
          _
        %s320 = sand.u32 %s30, 1
        %s321 = sand.u32 %s30, 1
        %s322 = smul.addr %s321, 24
        %s323 = scalar_lea.vmem [#allocation2], %s322
        %p324 = pneg %p43
        %p325 = pneg %p40
        %p326 = pneg %p64
        %p327 = pneg %p61
        %p328 = pneg %p85
        %p329 = pneg %p82
        %p330 = pneg %p106
        %p331 = pneg %p103
        %p332 = pneg %p127
        %p333 = pneg %p124
        %p334 = pneg %p148
        %p335 = pneg %p145
        %p336 = pneg %p169
        %p337 = pneg %p166
        %p338 = pneg %p190
        %p339 = pneg %p187
        %p340 = pneg %p216
        %p341 = pneg %p213
        %s342 = sand.u32 %s203, 1
        %s343 = scalar_lea.sflag [#allocation4], %s342
        %s344 = sand.u32 %s203, 1
        %s345 = smul.addr %s344, 4
        %s346 = scalar_lea.vmem [#allocation3], %s345
        %v347 = vld [vmem:[%s1] sm:$0xff]
        %v348 = vld [vmem:[%s1 + $0x8] sm:$0xff]
        %v349 = vld [vmem:[%s1 + $0x10] sm:$0xff]
        %v350 = vld [vmem:[%s1 + $0x18] sm:$0xff]
        %v351 = vld [vmem:[%s1 + $0x20] sm:$0xff]
        %v352 = vld [vmem:[%s1 + $0x28] sm:$0xff]
        %v353 = vld [vmem:[%s1 + $0x30] sm:$0xff]
        %v354 = vld [vmem:[%s1 + $0x38] sm:$0xff]
        %v355 = vld [vmem:[%s316] sm:$0xff]
        %v356 = vld [vmem:[%s316 + $0x8] sm:$0xff]
        %v357 = vld [vmem:[%s316 + $0x10] sm:$0x1]
        %vm358 = vcmask 138240
        %v360 = vsel %vm358, %v347, 0
        %v363 = vsel %vm358, %v348, 0
        %v366 = vsel %vm358, %v349, 0
        %v369 = vsel %vm358, %v350, 0
        %v372 = vsel %vm358, %v351, 0
        %v375 = vsel %vm358, %v352, 0
        %v378 = vsel %vm358, %v353, 0
        %v381 = vsel %vm358, %v354, 0
        %vm383 = vcmask 1040384
        %v385 = vsel %vm383, %v357, 0
        %387 = vmatprep.subr.mxu0 0.0
        %388 = vmatpush1.msra.mxu0 0.0
        %389 = vmatprep.subr.mxu0 0.0
        %390 = vmatpush1.msra.mxu0 0.0
        %391 = vmatprep.subr.mxu0 0.0
        %392 = vmatpush1.msra.mxu0 0.0
        %393 = vmatprep.subr.mxu0 0.0
        %394 = vmatpush1.msra.mxu0 0.0
        %395 = vmatprep.subr.mxu0 0.0
        %396 = vmatpush1.msra.mxu0 0.0
        %397 = vmatprep.subr.mxu0 0.0
        %398 = vmatpush1.msra.mxu0 0.0
        %399 = vmatprep.subr.mxu0 0.0
        %400 = vmatpush1.msra.mxu0 0.0
        %401 = vmatprep.subr.mxu0 0.0
        %402 = vmatpush1.msra.mxu0 0.0
        %403 = vmatprep.subr.mxu0 0.0
        %404 = vmatpush1.msra.mxu0 0.0
        %405 = vmatprep.subr.mxu0 0.0
        %406 = vmatpush1.msra.mxu0 0.0
        %407 = vmatprep.subr.mxu0 0.0
        %408 = vmatpush1.msra.mxu0 0.0
        %409 = vmatprep.subr.mxu0 0.0
        %410 = vmatpush1.msra.mxu0 0.0
        %411 = vmatprep.subr.mxu0 0.0
        %412 = vmatpush1.msra.mxu0 0.0
        %413 = vmatprep.subr.mxu0 0.0
        %414 = vmatpush1.msra.mxu0 %v385
        %415 = vmatprep.subr.mxu0 0.0
        %416 = vmatpush1.msra.mxu0 %v356
        %417 = vmatprep.subr.mxu0 0.0
        %418 = vmatpush1.msra.mxu0 %v355
        %419 = vmatprep.subr.mxu0 0.0
        %420 = vmatpush2.msra.mxu0 0.0
        %421 = vmatprep.subr.mxu0 0.0
        %422 = vmatpush2.msra.mxu0 0.0
        %423 = vmatprep.subr.mxu0 0.0
        %424 = vmatpush2.msra.mxu0 0.0
        %425 = vmatprep.subr.mxu0 0.0
        %426 = vmatpush2.msra.mxu0 0.0
        %427 = vmatprep.subr.mxu0 0.0
        %428 = vmatpush2.msra.mxu0 0.0
        %429 = vmatprep.subr.mxu0 0.0
        %430 = vmatpush2.msra.mxu0 0.0
        %431 = vmatprep.subr.mxu0 0.0
        %432 = vmatpush2.msra.mxu0 0.0
        %433 = vmatprep.subr.mxu0 0.0
        %434 = vmatpush2.msra.mxu0 0.0
        %435 = vmatprep.subr.mxu0 0.0
        %436 = vmatpush2.msra.mxu0 0.0
        %437 = vmatprep.subr.mxu0 0.0
        %438 = vmatpush2.msra.mxu0 0.0
        %439 = vmatprep.subr.mxu0 0.0
        %440 = vmatpush2.msra.mxu0 0.0
        %441 = vmatprep.subr.mxu0 0.0
        %442 = vmatpush2.msra.mxu0 0.0
        %443 = vmatprep.subr.mxu0 0.0
        %444 = vmatpush2.msra.mxu0 0.0
        %445 = vmatprep.subr.mxu0 0.0
        %446 = vmatpush2.msra.mxu0 0.0
        %447 = vmatprep.subr.mxu0 0.0
        %448 = vmatpush2.msra.mxu0 0.0
        %449 = vmatprep.subr.mxu0 0.0
        %450 = vmatpush2.msra.mxu0 0.0
        %451 = vmatprep.mubr.f32.mxu0 0.0
        %452 = vmatmul.mubr.f32.gmra.mxu0 %v360
        %v453 = vpop.f32.mrf.mxu0
        %v454 = vadd.f32 0.0, %v453
        %v455 = vpop.f32.mrf.mxu0
        %456 = vmatprep.mubr.f32.mxu0 0.0
        %457 = vmatmul.mubr.f32.gmra.mxu0 %v363
        %v458 = vpop.f32.mrf.mxu0
        %v459 = vadd.f32 0.0, %v458
        %v460 = vpop.f32.mrf.mxu0
        %461 = vmatprep.mubr.f32.mxu0 0.0
        %462 = vmatmul.mubr.f32.gmra.mxu0 %v366
        %v463 = vpop.f32.mrf.mxu0
        %v464 = vadd.f32 0.0, %v463
        %v465 = vpop.f32.mrf.mxu0
        %466 = vmatprep.mubr.f32.mxu0 0.0
        %467 = vmatmul.mubr.f32.gmra.mxu0 %v369
        %v468 = vpop.f32.mrf.mxu0
        %v469 = vadd.f32 0.0, %v468
        %v470 = vpop.f32.mrf.mxu0
        %471 = vmatprep.mubr.f32.mxu0 0.0
        %472 = vmatmul.mubr.f32.gmra.mxu0 %v372
        %v473 = vpop.f32.mrf.mxu0
        %v474 = vadd.f32 0.0, %v473
        %v475 = vpop.f32.mrf.mxu0
        %476 = vmatprep.mubr.f32.mxu0 0.0
        %477 = vmatmul.mubr.f32.gmra.mxu0 %v375
        %v478 = vpop.f32.mrf.mxu0
        %v479 = vadd.f32 0.0, %v478
        %v480 = vpop.f32.mrf.mxu0
        %481 = vmatprep.mubr.f32.mxu0 0.0
        %482 = vmatmul.mubr.f32.gmra.mxu0 %v378
        %v483 = vpop.f32.mrf.mxu0
        %v484 = vadd.f32 0.0, %v483
        %v485 = vpop.f32.mrf.mxu0
        %486 = vmatprep.mubr.f32.mxu0 0.0
        %487 = vmatmul.mubr.f32.gmra.mxu0 %v381
        %v488 = vpop.f32.mrf.mxu0
        %v489 = vadd.f32 0.0, %v488
        %v490 = vpop.f32.mrf.mxu0
        %491 = vdwg.mxu0
        %v492 = vmax.f32 %v454, 0.0
        %v493 = vmax.f32 %v459, 0.0
        %v494 = vmax.f32 %v464, 0.0
        %v495 = vmax.f32 %v469, 0.0
        %v496 = vmax.f32 %v474, 0.0
        %v497 = vmax.f32 %v479, 0.0
        %v498 = vmax.f32 %v484, 0.0
        %v499 = vmax.f32 %v489, 0.0
        %v500 = vld [vmem:[%s2] sm:$0xff]
        %v501 = vld [vmem:[%s2 + $0x8] sm:$0xff]
        %v502 = vld [vmem:[%s2 + $0x10] sm:$0xff]
        %v503 = vld [vmem:[%s2 + $0x18] sm:$0xff]
        %v504 = vld [vmem:[%s2 + $0x20] sm:$0xff]
        %v505 = vld [vmem:[%s2 + $0x28] sm:$0xff]
        %v506 = vld [vmem:[%s2 + $0x30] sm:$0xff]
        %v507 = vld [vmem:[%s2 + $0x38] sm:$0xff]
        %v508 = vld [vmem:[%s3] sm:$0xff]
        %v509 = vld [vmem:[%s3 + $0x8] sm:$0xff]
        %v510 = vld [vmem:[%s3 + $0x10] sm:$0xff]
        %v511 = vld [vmem:[%s3 + $0x18] sm:$0xff]
        %v512 = vld [vmem:[%s3 + $0x20] sm:$0xff]
        %v513 = vld [vmem:[%s3 + $0x28] sm:$0xff]
        %v514 = vld [vmem:[%s3 + $0x30] sm:$0xff]
        %v515 = vld [vmem:[%s3 + $0x38] sm:$0xff]
        %517 = vset.pattern.permute.xlu0 0
        %518 = vperm.xlu0 %517, %v508
        %v519 = vpop.permute.xlu0 %518
        %522 = vset.pattern.permute.xlu0 0
        %523 = vperm.xlu0 %522, %v509
        %v524 = vpop.permute.xlu0 %523
        %527 = vset.pattern.permute.xlu0 0
        %528 = vperm.xlu0 %527, %v510
        %v529 = vpop.permute.xlu0 %528
        %532 = vset.pattern.permute.xlu0 0
        %533 = vperm.xlu0 %532, %v511
        %v534 = vpop.permute.xlu0 %533
        %537 = vset.pattern.permute.xlu0 0
        %538 = vperm.xlu0 %537, %v512
        %v539 = vpop.permute.xlu0 %538
        %542 = vset.pattern.permute.xlu0 0
        %543 = vperm.xlu0 %542, %v513
        %v544 = vpop.permute.xlu0 %543
        %547 = vset.pattern.permute.xlu0 0
        %548 = vperm.xlu0 %547, %v514
        %v549 = vpop.permute.xlu0 %548
        %552 = vset.pattern.permute.xlu0 0
        %553 = vperm.xlu0 %552, %v515
        %v554 = vpop.permute.xlu0 %553
        %vm556 = vcmask 523264
        %v558 = vsel %vm556, %v500, 0
        %v561 = vsel %vm556, %v501, 0
        %v564 = vsel %vm556, %v502, 0
        %v567 = vsel %vm556, %v503, 0
        %v570 = vsel %vm556, %v504, 0
        %v573 = vsel %vm556, %v505, 0
        %v576 = vsel %vm556, %v506, 0
        %v579 = vsel %vm556, %v507, 0
        %581 = vmatprep.subr.mxu0 0.0
        %582 = vmatpush1.msra.mxu0 0.0
        %583 = vmatprep.subr.mxu0 0.0
        %584 = vmatpush1.msra.mxu0 0.0
        %585 = vmatprep.subr.mxu0 0.0
        %586 = vmatpush1.msra.mxu0 0.0
        %587 = vmatprep.subr.mxu0 0.0
        %588 = vmatpush1.msra.mxu0 0.0
        %589 = vmatprep.subr.mxu0 0.0
        %590 = vmatpush1.msra.mxu0 0.0
        %591 = vmatprep.subr.mxu0 0.0
        %592 = vmatpush1.msra.mxu0 0.0
        %593 = vmatprep.subr.mxu0 0.0
        %594 = vmatpush1.msra.mxu0 0.0
        %595 = vmatprep.subr.mxu0 0.0
        %596 = vmatpush1.msra.mxu0 0.0
        %597 = vmatprep.subr.mxu0 0.0
        %598 = vmatpush1.msra.mxu0 %v499
        %599 = vmatprep.subr.mxu0 0.0
        %600 = vmatpush1.msra.mxu0 %v498
        %601 = vmatprep.subr.mxu0 0.0
        %602 = vmatpush1.msra.mxu0 %v497
        %603 = vmatprep.subr.mxu0 0.0
        %604 = vmatpush1.msra.mxu0 %v496
        %605 = vmatprep.subr.mxu0 0.0
        %606 = vmatpush1.msra.mxu0 %v495
        %607 = vmatprep.subr.mxu0 0.0
        %608 = vmatpush1.msra.mxu0 %v494
        %609 = vmatprep.subr.mxu0 0.0
        %610 = vmatpush1.msra.mxu0 %v493
        %611 = vmatprep.subr.mxu0 0.0
        %612 = vmatpush1.msra.mxu0 %v492
        %613 = vmatprep.subr.mxu0 0.0
        %614 = vmatpush2.msra.mxu0 0.0
        %615 = vmatprep.subr.mxu0 0.0
        %616 = vmatpush2.msra.mxu0 0.0
        %617 = vmatprep.subr.mxu0 0.0
        %618 = vmatpush2.msra.mxu0 0.0
        %619 = vmatprep.subr.mxu0 0.0
        %620 = vmatpush2.msra.mxu0 0.0
        %621 = vmatprep.subr.mxu0 0.0
        %622 = vmatpush2.msra.mxu0 0.0
        %623 = vmatprep.subr.mxu0 0.0
        %624 = vmatpush2.msra.mxu0 0.0
        %625 = vmatprep.subr.mxu0 0.0
        %626 = vmatpush2.msra.mxu0 0.0
        %627 = vmatprep.subr.mxu0 0.0
        %628 = vmatpush2.msra.mxu0 0.0
        %629 = vmatprep.subr.mxu0 0.0
        %630 = vmatpush2.msra.mxu0 0.0
        %631 = vmatprep.subr.mxu0 0.0
        %632 = vmatpush2.msra.mxu0 0.0
        %633 = vmatprep.subr.mxu0 0.0
        %634 = vmatpush2.msra.mxu0 0.0
        %635 = vmatprep.subr.mxu0 0.0
        %636 = vmatpush2.msra.mxu0 0.0
        %637 = vmatprep.subr.mxu0 0.0
        %638 = vmatpush2.msra.mxu0 0.0
        %639 = vmatprep.subr.mxu0 0.0
        %640 = vmatpush2.msra.mxu0 0.0
        %641 = vmatprep.subr.mxu0 0.0
        %642 = vmatpush2.msra.mxu0 0.0
        %643 = vmatprep.subr.mxu0 0.0
        %644 = vmatpush2.msra.mxu0 0.0
        %645 = vmatprep.mubr.f32.mxu0 0.0
        %646 = vmatmul.mubr.f32.gmra.mxu0 %v558
        %v647 = vpop.f32.mrf.mxu0
        %v648 = vadd.f32 %v519, %v647
        %v649 = vpop.f32.mrf.mxu0
        %650 = vmatprep.mubr.f32.mxu0 0.0
        %651 = vmatmul.mubr.f32.gmra.mxu0 %v561
        %v652 = vpop.f32.mrf.mxu0
        %v653 = vadd.f32 %v524, %v652
        %v654 = vpop.f32.mrf.mxu0
        %655 = vmatprep.mubr.f32.mxu0 0.0
        %656 = vmatmul.mubr.f32.gmra.mxu0 %v564
        %v657 = vpop.f32.mrf.mxu0
        %v658 = vadd.f32 %v529, %v657
        %v659 = vpop.f32.mrf.mxu0
        %660 = vmatprep.mubr.f32.mxu0 0.0
        %661 = vmatmul.mubr.f32.gmra.mxu0 %v567
        %v662 = vpop.f32.mrf.mxu0
        %v663 = vadd.f32 %v534, %v662
        %v664 = vpop.f32.mrf.mxu0
        %665 = vmatprep.mubr.f32.mxu0 0.0
        %666 = vmatmul.mubr.f32.gmra.mxu0 %v570
        %v667 = vpop.f32.mrf.mxu0
        %v668 = vadd.f32 %v539, %v667
        %v669 = vpop.f32.mrf.mxu0
        %670 = vmatprep.mubr.f32.mxu0 0.0
        %671 = vmatmul.mubr.f32.gmra.mxu0 %v573
        %v672 = vpop.f32.mrf.mxu0
        %v673 = vadd.f32 %v544, %v672
        %v674 = vpop.f32.mrf.mxu0
        %675 = vmatprep.mubr.f32.mxu0 0.0
        %676 = vmatmul.mubr.f32.gmra.mxu0 %v576
        %v677 = vpop.f32.mrf.mxu0
        %v678 = vadd.f32 %v549, %v677
        %v679 = vpop.f32.mrf.mxu0
        %680 = vmatprep.mubr.f32.mxu0 0.0
        %681 = vmatmul.mubr.f32.gmra.mxu0 %v579
        %v682 = vpop.f32.mrf.mxu0
        %v683 = vadd.f32 %v554, %v682
        %v684 = vpop.f32.mrf.mxu0
        %685 = vdwg.mxu0
        %v686 = vmax.f32 %v648, 0.0
        %v687 = vmax.f32 %v653, 0.0
        %v688 = vmax.f32 %v658, 0.0
        %v689 = vmax.f32 %v663, 0.0
        %v690 = vmax.f32 %v668, 0.0
        %v691 = vmax.f32 %v673, 0.0
        %v692 = vmax.f32 %v678, 0.0
        %v693 = vmax.f32 %v683, 0.0
        %v694 = vld [vmem:[%s4] sm:$0xf]
        %v695 = vld [vmem:[%s5] sm:$0xf]
        %697 = vset.pattern.permute.xlu0 0
        %698 = vperm.xlu0 %697, %v695
        %v699 = vpop.permute.xlu0 %698
        %v702 = vsel %vm556, %v694, 0
        %704 = vmatprep.subr.mxu0 0.0
        %705 = vmatpush1.msra.mxu0 0.0
        %706 = vmatprep.subr.mxu0 0.0
        %707 = vmatpush1.msra.mxu0 0.0
        %708 = vmatprep.subr.mxu0 0.0
        %709 = vmatpush1.msra.mxu0 0.0
        %710 = vmatprep.subr.mxu0 0.0
        %711 = vmatpush1.msra.mxu0 0.0
        %712 = vmatprep.subr.mxu0 0.0
        %713 = vmatpush1.msra.mxu0 0.0
        %714 = vmatprep.subr.mxu0 0.0
        %715 = vmatpush1.msra.mxu0 0.0
        %716 = vmatprep.subr.mxu0 0.0
        %717 = vmatpush1.msra.mxu0 0.0
        %718 = vmatprep.subr.mxu0 0.0
        %719 = vmatpush1.msra.mxu0 0.0
        %720 = vmatprep.subr.mxu0 0.0
        %721 = vmatpush1.msra.mxu0 %v693
        %722 = vmatprep.subr.mxu0 0.0
        %723 = vmatpush1.msra.mxu0 %v692
        %724 = vmatprep.subr.mxu0 0.0
        %725 = vmatpush1.msra.mxu0 %v691
        %726 = vmatprep.subr.mxu0 0.0
        %727 = vmatpush1.msra.mxu0 %v690
        %728 = vmatprep.subr.mxu0 0.0
        %729 = vmatpush1.msra.mxu0 %v689
        %730 = vmatprep.subr.mxu0 0.0
        %731 = vmatpush1.msra.mxu0 %v688
        %732 = vmatprep.subr.mxu0 0.0
        %733 = vmatpush1.msra.mxu0 %v687
        %734 = vmatprep.subr.mxu0 0.0
        %735 = vmatpush1.msra.mxu0 %v686
        %736 = vmatprep.subr.mxu0 0.0
        %737 = vmatpush2.msra.mxu0 0.0
        %738 = vmatprep.subr.mxu0 0.0
        %739 = vmatpush2.msra.mxu0 0.0
        %740 = vmatprep.subr.mxu0 0.0
        %741 = vmatpush2.msra.mxu0 0.0
        %742 = vmatprep.subr.mxu0 0.0
        %743 = vmatpush2.msra.mxu0 0.0
        %744 = vmatprep.subr.mxu0 0.0
        %745 = vmatpush2.msra.mxu0 0.0
        %746 = vmatprep.subr.mxu0 0.0
        %747 = vmatpush2.msra.mxu0 0.0
        %748 = vmatprep.subr.mxu0 0.0
        %749 = vmatpush2.msra.mxu0 0.0
        %750 = vmatprep.subr.mxu0 0.0
        %751 = vmatpush2.msra.mxu0 0.0
        %752 = vmatprep.subr.mxu0 0.0
        %753 = vmatpush2.msra.mxu0 0.0
        %754 = vmatprep.subr.mxu0 0.0
        %755 = vmatpush2.msra.mxu0 0.0
        %756 = vmatprep.subr.mxu0 0.0
        %757 = vmatpush2.msra.mxu0 0.0
        %758 = vmatprep.subr.mxu0 0.0
        %759 = vmatpush2.msra.mxu0 0.0
        %760 = vmatprep.subr.mxu0 0.0
        %761 = vmatpush2.msra.mxu0 0.0
        %762 = vmatprep.subr.mxu0 0.0
        %763 = vmatpush2.msra.mxu0 0.0
        %764 = vmatprep.subr.mxu0 0.0
        %765 = vmatpush2.msra.mxu0 0.0
        %766 = vmatprep.subr.mxu0 0.0
        %767 = vmatpush2.msra.mxu0 0.0
        %768 = vmatprep.mubr.f32.mxu0 0.0
        %769 = vmatmul.mubr.f32.gmra.mxu0 %v702
        %v770 = vpop.f32.mrf.mxu0
        %v771 = vadd.f32 %v699, %v770
        %v772 = vpop.f32.mrf.mxu0
        %773 = vdwg.mxu0
        %v774 = vtanh.pop %v771
        %v775 = vld [vmem:[%s6] sm:$0xf]
        %v776 = vld [vmem:[%s7] sm:$0xf]
        %778 = vset.pattern.permute.xlu0 0
        %779 = vperm.xlu0 %778, %v776
        %v780 = vpop.permute.xlu0 %779
        %v782 = vmul.f32 %v780, %v774
        %784 = vset.pattern.permute.xlu0 0
        %785 = vperm.xlu0 %784, %v775
        %v786 = vpop.permute.xlu0 %785
        %v788 = vadd.f32 %v786, %v782
        %789 = vst [vmem:[%s346] sm:$0xf] %v788
        %s790 = sand.u32 %s203, 1
        %s791 = scalar_lea.sflag [#allocation4], %s790
        %s792 = sand.u32 %s203, 1
        %s793 = smul.addr %s792, 4
        %s794 = scalar_lea.vmem [#allocation3], %s793
        // Predicated region
        $region91: #{_lambda_.1} parent=85 // pred_check
          %p795 = pneg %p213
        $region92: #{_lambda_.1} parent=85 // pred_check_branch
          %797 = sbr.rel (%p795) target = $region94
        $region93: #{_lambda_.1} parent=85 // pred_region
          %s799 = ssub.s32 64, 64
          %800 = vsyncadd %s791, %s799
          %s801 = smul.addr %s22, 64
          %s802 = scalar_lea.hbm %s8, %s801
          %s804 = sshll.u32 %s794, 4
          %s805 = int_to_ptr.vmem [resolvable:$true] %s804
          %807 = dma.vmem_to_hbm [thread:$0]  %s805, 64, %s802, %s791
        $region94: #{_lambda_.1} parent=85 // pred_fallthru
          _
      $region86: #{_lambda_.1} parent=5 // pred_fallthru
        _
      %p808 = scmp.le.s32.totalorder 2, %s17
      // Predicated region
      $region95: #{_lambda_.1} parent=5 // pred_check
        %p809 = pneg %p808
      $region96: #{_lambda_.1} parent=5 // pred_check_branch
        %811 = sbr.rel (%p809) target = $region98
      $region97: #{_lambda_.1} parent=5 // pred_region
        %s812 = ssub.s32 %s17, 2
        // Predicated region
        $region99: #{_lambda_.1} parent=97 // pred_check
          %p813 = pneg %p219
        $region100: #{_lambda_.1} parent=97 // pred_check_branch
          %815 = sbr.rel (%p813) target = $region102
        $region101: #{_lambda_.1} parent=97 // pred_region
          %s816 = sand.u32 %s204, 1
          %s817 = scalar_lea.sflag [#allocation4], %s816
          %s818 = sand.u32 %s204, 1
          %s819 = smul.addr %s818, 4
          %s820 = scalar_lea.vmem [#allocation3], %s819
          %821 = dma.done %s817, 64
        $region102: #{_lambda_.1} parent=97 // pred_fallthru
          _
      $region98: #{_lambda_.1} parent=5 // pred_fallthru
        _
    $region6: #{_lambda_.1} parent=1 // loop_footer
      %s21 = sadd.s32 1, %s17
    $region7: #{_lambda_.1} parent=1 // loop_footer_branch
      %16 = sbr.rel target = $region3
    $region8: #{_lambda_.1} parent=1 // loop_exit
      _
    %822 = vsyncpa [#allocation4], 1
    %s823 = scalar_lea.sflag [#allocation4], 1
    %824 = vsyncpa %s823, 1

</llo_original>
